<compile_context>
chip_gen: v6e
topology: v6e:2x2x1
jax: 0.10.0
libtpu: 0.0.40
codegen_flags: <defaults>
</compile_context>

<pallas_src>
import jax
import jax.numpy as jnp
from jax import lax
from jax.experimental import pallas as pl
from jax.experimental.pallas import tpu as pltpu


def _round_up(x, m):
    return (x + m - 1) // m * m


def _mf_gather_kernel(idx_ref, w_hbm, h_hbm, out_ref, u_buf, v_buf, sems):
    """One batch tile of TB examples.

    idx_ref : SMEM (2, B_pad) int32   row 0 = user ids, row 1 = item ids
    w_hbm   : HBM  (U, K) f32         user embedding table (pl.ANY)
    h_hbm   : HBM  (I, K) f32         item embedding table (pl.ANY)
    out_ref : VMEM (1, TB) f32        lane-dense per-example dot products
    u_buf   : VMEM (TB, K) f32        gathered user rows (scratch)
    v_buf   : VMEM (TB, K) f32        gathered item rows (scratch)
    sems    : DMA semaphores (2,)     [0] for W copies, [1] for H copies
    """
    tb, k = u_buf.shape
    base = pl.program_id(0) * tb

    # Issue all row-gather DMAs for this tile; they overlap in the DMA engine.
    @pl.loop(0, tb)
    def _issue(r):
        uid = idx_ref[0, base + r]
        iid = idx_ref[1, base + r]
        pltpu.make_async_copy(
            w_hbm.at[pl.ds(uid, 1)], u_buf.at[pl.ds(r, 1)], sems.at[0]
        ).start()
        pltpu.make_async_copy(
            h_hbm.at[pl.ds(iid, 1)], v_buf.at[pl.ds(r, 1)], sems.at[1]
        ).start()

    # Drain: each wait consumes exactly one row-copy's worth of the semaphore
    # (all copies on a given semaphore have identical byte counts).
    @pl.loop(0, tb)
    def _drain(r):
        pltpu.make_async_copy(
            w_hbm.at[pl.ds(0, 1)], u_buf.at[pl.ds(0, 1)], sems.at[0]
        ).wait()
        pltpu.make_async_copy(
            h_hbm.at[pl.ds(0, 1)], v_buf.at[pl.ds(0, 1)], sems.at[1]
        ).wait()

    # Elementwise product on the VPU, then reduce over K while relayouting the
    # per-example sums onto the lane axis: ones(8,K) @ prod^T -> (8, TB), all
    # rows identical; row 0 is the lane-dense (1, TB) result.
    prod = u_buf[...] * v_buf[...]                      # (TB, K) f32
    ones = jnp.ones((8, k), dtype=jnp.float32)
    res = lax.dot_general(
        ones, prod,
        dimension_numbers=(((1,), (1,)), ((), ())),     # contract K with K
        preferred_element_type=jnp.float32,
    )                                                   # (8, TB)
    out_ref[...] = res[0:1, :]                          # unmasked lane-dense store


def mf_snips_forward(x_idx, W, H, *, tile_b=512):
    """Pallas equivalent of MF_SNIPS.forward(x, is_training=False).

    x_idx : (B, 2) int  column 0 = user index, column 1 = item index
    W     : (num_users, K) f32
    H     : (num_items, K) f32
    returns (B,) f32
    """
    B = int(x_idx.shape[0])
    num_users, K = W.shape
    num_items = H.shape[0]

    # Clamp indices so an out-of-range id can never drive an OOB HBM DMA
    # (PyTorch's Embedding would raise; silent zeros of the old one-hot path
    # are gone either way).
    user_idx = jnp.clip(x_idx[:, 0].astype(jnp.int32), 0, num_users - 1)
    item_idx = jnp.clip(x_idx[:, 1].astype(jnp.int32), 0, num_items - 1)

    # Batch tiling: TB is a multiple of 128 (lane-dense output), up to tile_b.
    if B >= tile_b:
        tb = tile_b
    else:
        tb = _round_up(max(B, 1), 128)
    b_pad = _round_up(max(B, 1), tb)
    n_tiles = b_pad // tb

    # (2, B_pad) int32 index table; long axis last keeps SMEM padding small.
    idx2 = jnp.zeros((2, b_pad), dtype=jnp.int32)
    idx2 = idx2.at[0, :B].set(user_idx)
    idx2 = idx2.at[1, :B].set(item_idx)

    grid_spec = pltpu.PrefetchScalarGridSpec(
        num_scalar_prefetch=1,
        grid=(n_tiles,),
        in_specs=[
            pl.BlockSpec(memory_space=pl.ANY),   # W stays in HBM; rows DMA'd on demand
            pl.BlockSpec(memory_space=pl.ANY),   # H stays in HBM
        ],
        out_specs=pl.BlockSpec((1, tb), lambda i, idx: (0, i)),
        scratch_shapes=[
            pltpu.VMEM((tb, K), jnp.float32),
            pltpu.VMEM((tb, K), jnp.float32),
            pltpu.SemaphoreType.DMA((2,)),
        ],
    )

    out = pl.pallas_call(
        _mf_gather_kernel,
        out_shape=jax.ShapeDtypeStruct((1, b_pad), jnp.float32),
        grid_spec=grid_spec,
        compiler_params=pltpu.CompilerParams(
            # Independent batch tiles: shard across the 2 TensorCores on v7x.
            dimension_semantics=("parallel",),
        ),
    )(idx2, W.astype(jnp.float32), H.astype(jnp.float32))

    return out[0, :B]


if __name__ == "__main__":
    # Small shapes consistent with the module (embedding_k defaults to 4).
    num_users = 32
    num_items = 48
    embedding_k = 4
    batch = 8

    key = jax.random.PRNGKey(0)
    k_w, k_h, k_u, k_i = jax.random.split(key, 4)

    # nn.Embedding default init ~ N(0, 1).
    W = jax.random.normal(k_w, (num_users, embedding_k), dtype=jnp.float32)
    H = jax.random.normal(k_h, (num_items, embedding_k), dtype=jnp.float32)

    user_idx = jax.random.randint(k_u, (batch,), 0, num_users, dtype=jnp.int32)
    item_idx = jax.random.randint(k_i, (batch,), 0, num_items, dtype=jnp.int32)
    x_idx = jnp.stack([user_idx, item_idx], axis=1)      # (batch, 2) int32

    out = jax.block_until_ready(mf_snips_forward(x_idx, W, H))
    ref = jnp.sum(W[user_idx] * H[item_idx], axis=1)
    assert out.shape == (batch,)
    assert jnp.allclose(out, ref, atol=1e-5, rtol=1e-5), (out, ref)

    # Second check: multi-tile grid (exercises batch tiling, padding and the
    # "parallel" batch axis) with larger tables.
    batch2, num_users2, num_items2 = 700, 500, 300
    k_w2, k_h2, k_u2, k_i2 = jax.random.split(jax.random.PRNGKey(1), 4)
    W2 = jax.random.normal(k_w2, (num_users2, embedding_k), dtype=jnp.float32)
    H2 = jax.random.normal(k_h2, (num_items2, embedding_k), dtype=jnp.float32)
    u2 = jax.random.randint(k_u2, (batch2,), 0, num_users2, dtype=jnp.int32)
    i2 = jax.random.randint(k_i2, (batch2,), 0, num_items2, dtype=jnp.int32)
    x2 = jnp.stack([u2, i2], axis=1)

    out2 = jax.block_until_ready(mf_snips_forward(x2, W2, H2))
    ref2 = jnp.sum(W2[u2] * H2[i2], axis=1)
    assert out2.shape == (batch2,)
    assert jnp.allclose(out2, ref2, atol=1e-5, rtol=1e-5)

    print("KERNEL_OK")
</pallas_src>

<mosaic_0001>
module attributes {stable_mosaic.version = 11 : i64} {
  func.func @_mf_gather_kernel(%arg0: i32, %arg1: memref<2x128xi32, #tpu.memory_space<smem>>, %arg2: memref<32x4xf32, #tpu.memory_space<any>>, %arg3: memref<48x4xf32, #tpu.memory_space<any>>, %arg4: memref<1x128xf32, #tpu.memory_space<vmem>>, %arg5: memref<128x4xf32, #tpu.memory_space<vmem>>, %arg6: memref<128x4xf32, #tpu.memory_space<vmem>>, %arg7: memref<2x!tpu.dma_semaphore, #tpu.memory_space<semaphore_mem>>) attributes {dimension_semantics = [#tpu.dimension_semantics<parallel>], iteration_bounds = array<i64: 1>, scalar_prefetch = 1 : i64, scratch_operands = 3 : i64, tpu.core_type = #tpu.core_type<tc>, window_params = [{}, {}, {transform_indices = @transform_2, window_bounds = array<i64: 1, 128>}]} {
    %c128_i32 = arith.constant 128 : i32
    %0 = arith.muli %arg0, %c128_i32 : i32
    %c0_i32 = arith.constant 0 : i32
    %c128_i32_0 = arith.constant 128 : i32
    %1 = arith.addi %c0_i32, %c128_i32_0 : i32
    %c1_i32 = arith.constant 1 : i32
    scf.for %arg8 = %c0_i32 to %1 step %c1_i32  : i32 {
      %c1_i32_11 = arith.constant 1 : i32
      %10 = arith.muli %arg8, %c1_i32_11 : i32
      %c0_i32_12 = arith.constant 0 : i32
      %11 = arith.addi %c0_i32_12, %10 : i32
      %12 = arith.addi %0, %11 : i32
      %c0_13 = arith.constant 0 : index
      %13 = arith.index_cast %12 : i32 to index
      %14 = memref.load %arg1[%c0_13, %13] : memref<2x128xi32, #tpu.memory_space<smem>>
      %15 = arith.addi %0, %11 : i32
      %c1 = arith.constant 1 : index
      %16 = arith.index_cast %15 : i32 to index
      %17 = memref.load %arg1[%c1, %16] : memref<2x128xi32, #tpu.memory_space<smem>>
      %c0_i32_14 = arith.constant 0 : i32
      %c0_i32_15 = arith.constant 0 : i32
      %18 = tpu.memref_slice %arg2[%14, %c0_i32_15] : memref<32x4xf32, #tpu.memory_space<any>> -> memref<1x4xf32, #tpu.memory_space<any>>
      %c0_i32_16 = arith.constant 0 : i32
      %19 = tpu.memref_slice %arg5[%11, %c0_i32_16] : memref<128x4xf32, #tpu.memory_space<vmem>> -> memref<1x4xf32, #tpu.memory_space<vmem>>
      %20 = tpu.memref_slice %arg7[%c0_i32_14] : memref<2x!tpu.dma_semaphore, #tpu.memory_space<semaphore_mem>> -> memref<1x!tpu.dma_semaphore, #tpu.memory_space<semaphore_mem>>
      %21 = tpu.memref_squeeze %20 : memref<1x!tpu.dma_semaphore, #tpu.memory_space<semaphore_mem>> -> memref<!tpu.dma_semaphore, #tpu.memory_space<semaphore_mem>>
      tpu.enqueue_dma source(%18 : memref<1x4xf32, #tpu.memory_space<any>>) target(%19 : memref<1x4xf32, #tpu.memory_space<vmem>>) target_semaphore(%21 : memref<!tpu.dma_semaphore, #tpu.memory_space<semaphore_mem>>)
      %c1_i32_17 = arith.constant 1 : i32
      %c0_i32_18 = arith.constant 0 : i32
      %22 = tpu.memref_slice %arg3[%17, %c0_i32_18] : memref<48x4xf32, #tpu.memory_space<any>> -> memref<1x4xf32, #tpu.memory_space<any>>
      %c0_i32_19 = arith.constant 0 : i32
      %23 = tpu.memref_slice %arg6[%11, %c0_i32_19] : memref<128x4xf32, #tpu.memory_space<vmem>> -> memref<1x4xf32, #tpu.memory_space<vmem>>
      %24 = tpu.memref_slice %arg7[%c1_i32_17] : memref<2x!tpu.dma_semaphore, #tpu.memory_space<semaphore_mem>> -> memref<1x!tpu.dma_semaphore, #tpu.memory_space<semaphore_mem>>
      %25 = tpu.memref_squeeze %24 : memref<1x!tpu.dma_semaphore, #tpu.memory_space<semaphore_mem>> -> memref<!tpu.dma_semaphore, #tpu.memory_space<semaphore_mem>>
      tpu.enqueue_dma source(%22 : memref<1x4xf32, #tpu.memory_space<any>>) target(%23 : memref<1x4xf32, #tpu.memory_space<vmem>>) target_semaphore(%25 : memref<!tpu.dma_semaphore, #tpu.memory_space<semaphore_mem>>)
    }
    %c128_i32_1 = arith.constant 128 : i32
    %c0_i32_2 = arith.constant 0 : i32
    %c128_i32_3 = arith.constant 128 : i32
    %2 = arith.addi %c0_i32_2, %c128_i32_3 : i32
    %c1_i32_4 = arith.constant 1 : i32
    scf.for %arg8 = %c0_i32_2 to %2 step %c1_i32_4  : i32 {
      %c0_i32_11 = arith.constant 0 : i32
      %c0_i32_12 = arith.constant 0 : i32
      %c0_i32_13 = arith.constant 0 : i32
      %10 = tpu.memref_slice %arg2[%c0_i32_12, %c0_i32_13] : memref<32x4xf32, #tpu.memory_space<any>> -> memref<1x4xf32, #tpu.memory_space<any>>
      %c0_i32_14 = arith.constant 0 : i32
      %c0_i32_15 = arith.constant 0 : i32
      %11 = tpu.memref_slice %arg5[%c0_i32_14, %c0_i32_15] : memref<128x4xf32, #tpu.memory_space<vmem>> -> memref<1x4xf32, #tpu.memory_space<vmem>>
      %12 = tpu.memref_slice %arg7[%c0_i32_11] : memref<2x!tpu.dma_semaphore, #tpu.memory_space<semaphore_mem>> -> memref<1x!tpu.dma_semaphore, #tpu.memory_space<semaphore_mem>>
      %13 = tpu.memref_squeeze %12 : memref<1x!tpu.dma_semaphore, #tpu.memory_space<semaphore_mem>> -> memref<!tpu.dma_semaphore, #tpu.memory_space<semaphore_mem>>
      tpu.wait_dma2 semaphore(%13 : memref<!tpu.dma_semaphore, #tpu.memory_space<semaphore_mem>>) src(%10 : memref<1x4xf32, #tpu.memory_space<any>>) dst(%11 : memref<1x4xf32, #tpu.memory_space<vmem>>)
      %c1_i32_16 = arith.constant 1 : i32
      %c0_i32_17 = arith.constant 0 : i32
      %c0_i32_18 = arith.constant 0 : i32
      %14 = tpu.memref_slice %arg3[%c0_i32_17, %c0_i32_18] : memref<48x4xf32, #tpu.memory_space<any>> -> memref<1x4xf32, #tpu.memory_space<any>>
      %c0_i32_19 = arith.constant 0 : i32
      %c0_i32_20 = arith.constant 0 : i32
      %15 = tpu.memref_slice %arg6[%c0_i32_19, %c0_i32_20] : memref<128x4xf32, #tpu.memory_space<vmem>> -> memref<1x4xf32, #tpu.memory_space<vmem>>
      %16 = tpu.memref_slice %arg7[%c1_i32_16] : memref<2x!tpu.dma_semaphore, #tpu.memory_space<semaphore_mem>> -> memref<1x!tpu.dma_semaphore, #tpu.memory_space<semaphore_mem>>
      %17 = tpu.memref_squeeze %16 : memref<1x!tpu.dma_semaphore, #tpu.memory_space<semaphore_mem>> -> memref<!tpu.dma_semaphore, #tpu.memory_space<semaphore_mem>>
      tpu.wait_dma2 semaphore(%17 : memref<!tpu.dma_semaphore, #tpu.memory_space<semaphore_mem>>) src(%14 : memref<1x4xf32, #tpu.memory_space<any>>) dst(%15 : memref<1x4xf32, #tpu.memory_space<vmem>>)
    }
    %c0 = arith.constant 0 : index
    %c0_5 = arith.constant 0 : index
    %3 = vector.load %arg5[%c0, %c0_5] : memref<128x4xf32, #tpu.memory_space<vmem>>, vector<128x4xf32>
    %c0_6 = arith.constant 0 : index
    %c0_7 = arith.constant 0 : index
    %4 = vector.load %arg6[%c0_6, %c0_7] : memref<128x4xf32, #tpu.memory_space<vmem>>, vector<128x4xf32>
    %5 = arith.mulf %3, %4 : vector<128x4xf32>
    %cst = arith.constant 1.000000e+00 : f32
    %6 = vector.broadcast %cst : f32 to vector<8x4xf32>
    %cst_8 = arith.constant dense<0.000000e+00> : vector<8x128xf32>
    %7 = tpu.matmul %6, %5, %cst_8 {dimension_numbers = #tpu.dot_dimension_numbers<[1], [1], [0], [0], [0, 0, 1, 0], [], []>} : vector<8x4xf32>, vector<128x4xf32>, vector<8x128xf32> -> vector<8x128xf32>
    %8 = vector.extract_strided_slice %7 {offsets = [0, 0], sizes = [1, 128], strides = [1, 1]} : vector<8x128xf32> to vector<1x128xf32>
    %c0_9 = arith.constant 0 : index
    %c0_10 = arith.constant 0 : index
    %9 = vector.load %arg4[%c0_9, %c0_10] : memref<1x128xf32, #tpu.memory_space<vmem>>, vector<1x128xf32>
    tpu.vector_store %arg4[%c0_9, %c0_10], %8 {strides = array<i32>} : memref<1x128xf32, #tpu.memory_space<vmem>>, vector<1x128xf32>,
    return
  }
  func.func @transform_2(%arg0: i32, %arg1: memref<2x128xi32, #tpu.memory_space<smem>>) -> (i32, i32) {
    %c0_i32 = arith.constant 0 : i32
    %c0_i32_0 = arith.constant 0 : i32
    return %c0_i32, %arg0 : i32, i32
  }
}

</mosaic_0001>

<llo_original>
// kernel: tpu_custom_call.1
$region0: #{tpu_custom_call.1}
  #allocation0 [shape = 'u32[]', space=smem, size = 0x4, offset = 0x4, fixed_abs, tag = 'smem constant byte address 0x4 - core index']
  #allocation1 [shape = 'u32[144,128]{1,0:T(1,128)}', space=vmem, size = 0x12000, scoped, tag = 'internal scratch']
  #allocation2 [shape = 'f32[128,4]{1,0:T(8,128)}', space=vmem, size = 0x10000, scoped, tag = 'scratch operand']
  #allocation3 [shape = 'f32[128,4]{1,0:T(8,128)}', space=vmem, size = 0x10000, scoped, tag = 'scratch operand']
  #allocation4 [shape = 's32[2]{0}', space=sflag, size = 0x8, scoped, tag = 'scratch operand']
  #allocation5 [shape = 's32[1]{0}', space=sflag, size = 0x4, scoped, tag = 'scoped memory for tpu_custom_call.1']
  #allocation6 [shape = 'u8[1024]{0}', space=smem, size = 0x400, scoped, tag = 'prefetched SMEM operand 0']
  #allocation9 [shape = 's32[]', space=sflag, size = 0x4, offset = 0, fixed_abs, tag = 'sflag constant byte address 0x0 - dummy sync flag']
  #allocation10 [shape = 's32[]', space=sflag, size = 0x4, offset = 0, fixed_abs, tag = 'sflag constant byte address 0x0 - dummy sync flag']
  %s0 = inlined_call_operand.vmem [shape: s32[2,128], index: 0, kind: input, shape index: {}]
  %s1 = inlined_call_operand.vmem [shape: f32[32,4], index: 1, kind: input, shape index: {}]
  %s2 = inlined_call_operand.vmem [shape: f32[48,4], index: 2, kind: input, shape index: {}]
  %s3 = inlined_call_operand.hbm [shape: f32[1,128], index: 3, kind: output, shape index: {}]
  %s4 = sld [smem:[#allocation0]]
  $region84: #{tpu_custom_call.1} parent=0
    _
  %s6 = ssub.s32 1, %s4
  %s7 = scalar_select 0, %s6, %s4
  %s8 = sshll.u32 %s0, 4
  %s9 = int_to_ptr.vmem [resolvable:$true] %s8
  %11 = dma.vmem_to_smem %s9, 32, [#allocation6], [#allocation5]
  %12 = dma.done [#allocation5], 32
  %13 = sfence
  $region1: #{tpu_custom_call.1} parent=0
    #allocation7 [shape = 'u8[512]{0}', space=vmem, size = 0x400, scoped, tag = 'output window, operand 0, single buffered']
    #allocation8 [shape = 's32[1]{0}', space=sflag, size = 0x4, scoped, tag = 'scoped memory for tpu_custom_call.1']
    %14 = vsyncpa [#allocation8], 0
    %s15 = smul.u32 0, 128
    loop: start=0, step=1, limit=128
    $region2: #{tpu_custom_call.1} parent=1 // loop_pre_header
      _
    $region3: #{tpu_custom_call.1} parent=1 // loop_header
      %s17 = sphi 0, %s21
      %p18 = scmp.ge.s32.totalorder %s17, 128
    $region4: #{tpu_custom_call.1} parent=1 // loop_header_branch
      %20 = sbr.rel (%p18) target = $region8
    $region5: #{tpu_custom_call.1} parent=1 // loop_body
      %s22 = sadd.s32 %s15, %s17
      %s23 = sld [smem:[#allocation6 + %s22]]
      %s24 = sshra.s32 %s22, 7
      %s25 = sand.u32 %s22, 127
      %s26 = sadd.s32 %s24, 1
      %s27 = smul.u32 %s26, 128
      %s28 = sshra.s32 %s22, 7
      %s29 = sand.u32 %s22, 127
      %s30 = sadd.s32 %s27, %s29
      %s31 = sld [smem:[#allocation6 + %s30]]
      %s32 = scalar_lea.vmem %s1, %s23
      %s33 = scalar_lea.vmem [#allocation2], %s17
      %p35 = scmp.lt.u32.totalorder 1, 8
      %p36 = pneg %p35
      // Predicated region
      $region9: #{tpu_custom_call.1} parent=5 // pred_check
        _
      $region10: #{tpu_custom_call.1} parent=5 // pred_check_branch
        %38 = sbr.rel (%p35) target = $region12
      $region11: #{tpu_custom_call.1} parent=5 // pred_region
        %s54 = sand.u32 1, 7
        %p55 = scmp.eq.s32.totalorder %s54, 0
        %p56 = pneg %p55
        // Predicated region
        $region24: #{tpu_custom_call.1} parent=11 // pred_check
          _
        $region25: #{tpu_custom_call.1} parent=11 // pred_check_branch
          %58 = sbr.rel (%p55) target = $region27
        $region26: #{tpu_custom_call.1} parent=11 // pred_region
          %s59 = sand.u32 1, 7
          %s60 = ssub.s32 1, %s59
          %s61 = scalar_lea.vmem %s32, %s60
          %s62 = ssub.s32 1, %s59
          %s63 = scalar_lea.vmem %s33, %s62 [#allocation2]
          %s64 = sshll.u32 1, %s59
          %s65 = ssub.s32 %s64, 1
          loop: start=0, step=1, limit=1
          $region28: #{tpu_custom_call.1} parent=26 // loop_pre_header
            _
          $region29: #{tpu_custom_call.1} parent=26 // loop_header
            %s67 = sphi 0, %s71
            %p68 = scmp.ge.s32.totalorder %s67, 1
            %s72 = sphi %s61, %s61
            %s73 = sphi %s63, %s63
          $region30: #{tpu_custom_call.1} parent=26 // loop_header_branch
            %70 = sbr.rel (%p68) target = $region34
          $region31: #{tpu_custom_call.1} parent=26 // loop_body
            %v74 = vld [vmem:[%s72] sm:%s65]
            %75 = vst [vmem:[%s73] sm:%s65] %v74
          $region32: #{tpu_custom_call.1} parent=26 // loop_footer
            %s71 = sadd.s32 1, %s67
          $region33: #{tpu_custom_call.1} parent=26 // loop_footer_branch
            %66 = sbr.rel target = $region29
          $region34: #{tpu_custom_call.1} parent=26 // loop_exit
            _
        $region27: #{tpu_custom_call.1} parent=11 // pred_fallthru
          _
      $region12: #{tpu_custom_call.1} parent=5 // pred_fallthru
        _
      // Predicated region
      $region13: #{tpu_custom_call.1} parent=5 // pred_check
        %p39 = pneg %p35
      $region14: #{tpu_custom_call.1} parent=5 // pred_check_branch
        %41 = sbr.rel (%p39) target = $region16
      $region15: #{tpu_custom_call.1} parent=5 // pred_region
        %s42 = sshll.u32 1, 1
        %s43 = ssub.s32 %s42, 1
        loop: start=0, step=1, limit=1
        $region17: #{tpu_custom_call.1} parent=15 // loop_pre_header
          _
        $region18: #{tpu_custom_call.1} parent=15 // loop_header
          %s45 = sphi 0, %s49
          %p46 = scmp.ge.s32.totalorder %s45, 1
          %s50 = sphi %s32, %s32
          %s51 = sphi %s33, %s33
        $region19: #{tpu_custom_call.1} parent=15 // loop_header_branch
          %48 = sbr.rel (%p46) target = $region23
        $region20: #{tpu_custom_call.1} parent=15 // loop_body
          %v52 = vld [vmem:[%s50] sm:%s43]
          %53 = vst [vmem:[%s51] sm:%s43] %v52
        $region21: #{tpu_custom_call.1} parent=15 // loop_footer
          %s49 = sadd.s32 1, %s45
        $region22: #{tpu_custom_call.1} parent=15 // loop_footer_branch
          %44 = sbr.rel target = $region18
        $region23: #{tpu_custom_call.1} parent=15 // loop_exit
          _
      $region16: #{tpu_custom_call.1} parent=5 // pred_fallthru
        _
      // Predicated region
      $region35: #{tpu_custom_call.1} parent=5 // pred_check
        _
      $region36: #{tpu_custom_call.1} parent=5 // pred_check_branch
        %78 = sbr.rel (0) target = $region38
      $region37: #{tpu_custom_call.1} parent=5 // pred_region
        %79 = vsyncadd [#allocation4], 16
      $region38: #{tpu_custom_call.1} parent=5 // pred_fallthru
        _
      %s80 = scalar_lea.vmem %s2, %s31
      %s81 = scalar_lea.vmem [#allocation3], %s17
      %s82 = scalar_lea.sflag [#allocation4], 1
      %p84 = scmp.lt.u32.totalorder 1, 8
      %p85 = pneg %p84
      // Predicated region
      $region39: #{tpu_custom_call.1} parent=5 // pred_check
        _
      $region40: #{tpu_custom_call.1} parent=5 // pred_check_branch
        %87 = sbr.rel (%p84) target = $region42
      $region41: #{tpu_custom_call.1} parent=5 // pred_region
        %s103 = sand.u32 1, 7
        %p104 = scmp.eq.s32.totalorder %s103, 0
        %p105 = pneg %p104
        // Predicated region
        $region54: #{tpu_custom_call.1} parent=41 // pred_check
          _
        $region55: #{tpu_custom_call.1} parent=41 // pred_check_branch
          %107 = sbr.rel (%p104) target = $region57
        $region56: #{tpu_custom_call.1} parent=41 // pred_region
          %s108 = sand.u32 1, 7
          %s109 = ssub.s32 1, %s108
          %s110 = scalar_lea.vmem %s80, %s109
          %s111 = ssub.s32 1, %s108
          %s112 = scalar_lea.vmem %s81, %s111 [#allocation3]
          %s113 = sshll.u32 1, %s108
          %s114 = ssub.s32 %s113, 1
          loop: start=0, step=1, limit=1
          $region58: #{tpu_custom_call.1} parent=56 // loop_pre_header
            _
          $region59: #{tpu_custom_call.1} parent=56 // loop_header
            %s116 = sphi 0, %s120
            %p117 = scmp.ge.s32.totalorder %s116, 1
            %s121 = sphi %s110, %s110
            %s122 = sphi %s112, %s112
          $region60: #{tpu_custom_call.1} parent=56 // loop_header_branch
            %119 = sbr.rel (%p117) target = $region64
          $region61: #{tpu_custom_call.1} parent=56 // loop_body
            %v123 = vld [vmem:[%s121] sm:%s114]
            %124 = vst [vmem:[%s122] sm:%s114] %v123
          $region62: #{tpu_custom_call.1} parent=56 // loop_footer
            %s120 = sadd.s32 1, %s116
          $region63: #{tpu_custom_call.1} parent=56 // loop_footer_branch
            %115 = sbr.rel target = $region59
          $region64: #{tpu_custom_call.1} parent=56 // loop_exit
            _
        $region57: #{tpu_custom_call.1} parent=41 // pred_fallthru
          _
      $region42: #{tpu_custom_call.1} parent=5 // pred_fallthru
        _
      // Predicated region
      $region43: #{tpu_custom_call.1} parent=5 // pred_check
        %p88 = pneg %p84
      $region44: #{tpu_custom_call.1} parent=5 // pred_check_branch
        %90 = sbr.rel (%p88) target = $region46
      $region45: #{tpu_custom_call.1} parent=5 // pred_region
        %s91 = sshll.u32 1, 1
        %s92 = ssub.s32 %s91, 1
        loop: start=0, step=1, limit=1
        $region47: #{tpu_custom_call.1} parent=45 // loop_pre_header
          _
        $region48: #{tpu_custom_call.1} parent=45 // loop_header
          %s94 = sphi 0, %s98
          %p95 = scmp.ge.s32.totalorder %s94, 1
          %s99 = sphi %s80, %s80
          %s100 = sphi %s81, %s81
        $region49: #{tpu_custom_call.1} parent=45 // loop_header_branch
          %97 = sbr.rel (%p95) target = $region53
        $region50: #{tpu_custom_call.1} parent=45 // loop_body
          %v101 = vld [vmem:[%s99] sm:%s92]
          %102 = vst [vmem:[%s100] sm:%s92] %v101
        $region51: #{tpu_custom_call.1} parent=45 // loop_footer
          %s98 = sadd.s32 1, %s94
        $region52: #{tpu_custom_call.1} parent=45 // loop_footer_branch
          %93 = sbr.rel target = $region48
        $region53: #{tpu_custom_call.1} parent=45 // loop_exit
          _
      $region46: #{tpu_custom_call.1} parent=5 // pred_fallthru
        _
      // Predicated region
      $region65: #{tpu_custom_call.1} parent=5 // pred_check
        _
      $region66: #{tpu_custom_call.1} parent=5 // pred_check_branch
        %127 = sbr.rel (0) target = $region68
      $region67: #{tpu_custom_call.1} parent=5 // pred_region
        %128 = vsyncadd %s82, 16
      $region68: #{tpu_custom_call.1} parent=5 // pred_fallthru
        _
    $region6: #{tpu_custom_call.1} parent=1 // loop_footer
      %s21 = sadd.s32 1, %s17
    $region7: #{tpu_custom_call.1} parent=1 // loop_footer_branch
      %16 = sbr.rel target = $region3
    $region8: #{tpu_custom_call.1} parent=1 // loop_exit
      _
    loop: start=0, step=1, limit=128
    $region69: #{tpu_custom_call.1} parent=1 // loop_pre_header
      _
    $region70: #{tpu_custom_call.1} parent=1 // loop_header
      %s130 = sphi 0, %s134
      %p131 = scmp.ge.s32.totalorder %s130, 128
    $region71: #{tpu_custom_call.1} parent=1 // loop_header_branch
      %133 = sbr.rel (%p131) target = $region75
    $region72: #{tpu_custom_call.1} parent=1 // loop_body
      %s135 = smul.u32 1, 1
      %s136 = sshll.u32 %s135, 4
      %137 = dma.done [#allocation4], %s136
      %s138 = scalar_lea.sflag [#allocation4], 1
      %s139 = sshll.u32 %s135, 4
      %140 = dma.done %s138, %s139
    $region73: #{tpu_custom_call.1} parent=1 // loop_footer
      %s134 = sadd.s32 1, %s130
    $region74: #{tpu_custom_call.1} parent=1 // loop_footer_branch
      %129 = sbr.rel target = $region70
    $region75: #{tpu_custom_call.1} parent=1 // loop_exit
      _
    %v141 = vld [vmem:[#allocation2] sm:$0xff]
    %v142 = vld [vmem:[#allocation2 + $0x8] sm:$0xff]
    %v143 = vld [vmem:[#allocation2 + $0x10] sm:$0xff]
    %v144 = vld [vmem:[#allocation2 + $0x18] sm:$0xff]
    %v145 = vld [vmem:[#allocation2 + $0x20] sm:$0xff]
    %v146 = vld [vmem:[#allocation2 + $0x28] sm:$0xff]
    %v147 = vld [vmem:[#allocation2 + $0x30] sm:$0xff]
    %v148 = vld [vmem:[#allocation2 + $0x38] sm:$0xff]
    %v149 = vld [vmem:[#allocation2 + $0x40] sm:$0xff]
    %v150 = vld [vmem:[#allocation2 + $0x48] sm:$0xff]
    %v151 = vld [vmem:[#allocation2 + $0x50] sm:$0xff]
    %v152 = vld [vmem:[#allocation2 + $0x58] sm:$0xff]
    %v153 = vld [vmem:[#allocation2 + $0x60] sm:$0xff]
    %v154 = vld [vmem:[#allocation2 + $0x68] sm:$0xff]
    %v155 = vld [vmem:[#allocation2 + $0x70] sm:$0xff]
    %v156 = vld [vmem:[#allocation2 + $0x78] sm:$0xff]
    %v157 = vld [vmem:[#allocation3] sm:$0xff]
    %v158 = vld [vmem:[#allocation3 + $0x8] sm:$0xff]
    %v159 = vld [vmem:[#allocation3 + $0x10] sm:$0xff]
    %v160 = vld [vmem:[#allocation3 + $0x18] sm:$0xff]
    %v161 = vld [vmem:[#allocation3 + $0x20] sm:$0xff]
    %v162 = vld [vmem:[#allocation3 + $0x28] sm:$0xff]
    %v163 = vld [vmem:[#allocation3 + $0x30] sm:$0xff]
    %v164 = vld [vmem:[#allocation3 + $0x38] sm:$0xff]
    %v165 = vld [vmem:[#allocation3 + $0x40] sm:$0xff]
    %v166 = vld [vmem:[#allocation3 + $0x48] sm:$0xff]
    %v167 = vld [vmem:[#allocation3 + $0x50] sm:$0xff]
    %v168 = vld [vmem:[#allocation3 + $0x58] sm:$0xff]
    %v169 = vld [vmem:[#allocation3 + $0x60] sm:$0xff]
    %v170 = vld [vmem:[#allocation3 + $0x68] sm:$0xff]
    %v171 = vld [vmem:[#allocation3 + $0x70] sm:$0xff]
    %v172 = vld [vmem:[#allocation3 + $0x78] sm:$0xff]
    %v173 = vmul.f32 %v141, %v157
    %v174 = vmul.f32 %v142, %v158
    %v175 = vmul.f32 %v143, %v159
    %v176 = vmul.f32 %v144, %v160
    %v177 = vmul.f32 %v145, %v161
    %v178 = vmul.f32 %v146, %v162
    %v179 = vmul.f32 %v147, %v163
    %v180 = vmul.f32 %v148, %v164
    %v181 = vmul.f32 %v149, %v165
    %v182 = vmul.f32 %v150, %v166
    %v183 = vmul.f32 %v151, %v167
    %v184 = vmul.f32 %v152, %v168
    %v185 = vmul.f32 %v153, %v169
    %v186 = vmul.f32 %v154, %v170
    %v187 = vmul.f32 %v155, %v171
    %v188 = vmul.f32 %v156, %v172
    %vm189 = vcmask 31744
    %v191 = vsel %vm189, 1.0, 0
    %v194 = vsel %vm189, %v173, 0
    %v197 = vsel %vm189, %v174, 0
    %v200 = vsel %vm189, %v175, 0
    %v203 = vsel %vm189, %v176, 0
    %v206 = vsel %vm189, %v177, 0
    %v209 = vsel %vm189, %v178, 0
    %v212 = vsel %vm189, %v179, 0
    %v215 = vsel %vm189, %v180, 0
    %v218 = vsel %vm189, %v181, 0
    %v221 = vsel %vm189, %v182, 0
    %v224 = vsel %vm189, %v183, 0
    %v227 = vsel %vm189, %v184, 0
    %v230 = vsel %vm189, %v185, 0
    %v233 = vsel %vm189, %v186, 0
    %v236 = vsel %vm189, %v187, 0
    %v239 = vsel %vm189, %v188, 0
    %241 = vmatprep.subr.mxu0 0.0
    %242 = vmatpush1.xpose.msra.mxu0 %v239
    %243 = vmatprep.subr.mxu0 0.0
    %244 = vmatpush1.xpose.msra.mxu0 %v236
    %245 = vmatprep.subr.mxu0 0.0
    %246 = vmatpush1.xpose.msra.mxu0 %v233
    %247 = vmatprep.subr.mxu0 0.0
    %248 = vmatpush1.xpose.msra.mxu0 %v230
    %249 = vmatprep.subr.mxu0 0.0
    %250 = vmatpush1.xpose.msra.mxu0 %v227
    %251 = vmatprep.subr.mxu0 0.0
    %252 = vmatpush1.xpose.msra.mxu0 %v224
    %253 = vmatprep.subr.mxu0 0.0
    %254 = vmatpush1.xpose.msra.mxu0 %v221
    %255 = vmatprep.subr.mxu0 0.0
    %256 = vmatpush1.xpose.msra.mxu0 %v218
    %257 = vmatprep.subr.mxu0 0.0
    %258 = vmatpush1.xpose.msra.mxu0 %v215
    %259 = vmatprep.subr.mxu0 0.0
    %260 = vmatpush1.xpose.msra.mxu0 %v212
    %261 = vmatprep.subr.mxu0 0.0
    %262 = vmatpush1.xpose.msra.mxu0 %v209
    %263 = vmatprep.subr.mxu0 0.0
    %264 = vmatpush1.xpose.msra.mxu0 %v206
    %265 = vmatprep.subr.mxu0 0.0
    %266 = vmatpush1.xpose.msra.mxu0 %v203
    %267 = vmatprep.subr.mxu0 0.0
    %268 = vmatpush1.xpose.msra.mxu0 %v200
    %269 = vmatprep.subr.mxu0 0.0
    %270 = vmatpush1.xpose.msra.mxu0 %v197
    %271 = vmatprep.subr.mxu0 0.0
    %272 = vmatpush1.xpose.msra.mxu0 %v194
    %273 = vmatprep.subr.mxu0 0.0
    %274 = vmatpush2.xpose.msra.mxu0 0.0
    %275 = vmatprep.subr.mxu0 0.0
    %276 = vmatpush2.xpose.msra.mxu0 0.0
    %277 = vmatprep.subr.mxu0 0.0
    %278 = vmatpush2.xpose.msra.mxu0 0.0
    %279 = vmatprep.subr.mxu0 0.0
    %280 = vmatpush2.xpose.msra.mxu0 0.0
    %281 = vmatprep.subr.mxu0 0.0
    %282 = vmatpush2.xpose.msra.mxu0 0.0
    %283 = vmatprep.subr.mxu0 0.0
    %284 = vmatpush2.xpose.msra.mxu0 0.0
    %285 = vmatprep.subr.mxu0 0.0
    %286 = vmatpush2.xpose.msra.mxu0 0.0
    %287 = vmatprep.subr.mxu0 0.0
    %288 = vmatpush2.xpose.msra.mxu0 0.0
    %289 = vmatprep.subr.mxu0 0.0
    %290 = vmatpush2.xpose.msra.mxu0 0.0
    %291 = vmatprep.subr.mxu0 0.0
    %292 = vmatpush2.xpose.msra.mxu0 0.0
    %293 = vmatprep.subr.mxu0 0.0
    %294 = vmatpush2.xpose.msra.mxu0 0.0
    %295 = vmatprep.subr.mxu0 0.0
    %296 = vmatpush2.xpose.msra.mxu0 0.0
    %297 = vmatprep.subr.mxu0 0.0
    %298 = vmatpush2.xpose.msra.mxu0 0.0
    %299 = vmatprep.subr.mxu0 0.0
    %300 = vmatpush2.xpose.msra.mxu0 0.0
    %301 = vmatprep.subr.mxu0 0.0
    %302 = vmatpush2.xpose.msra.mxu0 0.0
    %303 = vmatprep.subr.mxu0 0.0
    %304 = vmatpush2.xpose.msra.mxu0 0.0
    %305 = vmatprep.mubr.f32.mxu0 0.0
    %306 = vmatmul.mubr.f32.gmra.mxu0 %v191
    %v307 = vpop.f32.mrf.mxu0
    %v308 = vadd.f32 0.0, %v307
    %v309 = vpop.f32.mrf.mxu0
    %310 = vdwg.mxu0
    %311 = vst [vmem:[#allocation7] sm:$0x1] %v308
    // Predicated region
    $region76: #{tpu_custom_call.1} parent=1 // pred_check
      _
    $region77: #{tpu_custom_call.1} parent=1 // pred_check_branch
      %313 = sbr.rel (0) target = $region79
    $region78: #{tpu_custom_call.1} parent=1 // pred_region
      %s315 = ssub.s32 16, 16
      %316 = vsyncadd [#allocation8], %s315
      %s318 = sshll.u32 [#allocation7], 4
      %s319 = int_to_ptr.vmem [resolvable:$true] %s318
      %321 = dma.vmem_to_hbm [thread:$0]  %s319, 16, %s3, [#allocation8]
    $region79: #{tpu_custom_call.1} parent=1 // pred_fallthru
      _
    // Predicated region
    $region80: #{tpu_custom_call.1} parent=1 // pred_check
      _
    $region81: #{tpu_custom_call.1} parent=1 // pred_check_branch
      %323 = sbr.rel (0) target = $region83
    $region82: #{tpu_custom_call.1} parent=1 // pred_region
      %324 = dma.done [#allocation8], 16
    $region83: #{tpu_custom_call.1} parent=1 // pred_fallthru
      _
    %325 = vsyncpa [#allocation8], 1
  %326 = vsyncmov [#allocation4]
  %s327 = vpop.sfrf %326
  %p328 = scmp.eq.s32.totalorder %s327, 0
  %p329 = pneg %p328
  %331 = shalt.err (%p329)
  %s332 = scalar_lea.sflag [#allocation4], 1
  %333 = vsyncmov %s332
  %s334 = vpop.sfrf %333
  %p335 = scmp.eq.s32.totalorder %s334, 0
  %p336 = pneg %p335
  %338 = shalt.err (%p336)

</llo_original>
